<compile_context>
chip_gen: v7x
topology: tpu7x:2x2x1
jax: 0.10.0
libtpu: 0.0.40
codegen_flags: <defaults>
</compile_context>

<pallas_src>
import jax
import jax.numpy as jnp
from jax.experimental import pallas as pl
from jax.experimental.pallas import tpu as pltpu

BATCH = 2
H = W = 28
C_OUT = 16
KS = 3        # TODO(synk): reference nn.Conv2d(1, 16, stride=1, padding=1) omits
              # kernel_size (it would not even construct in torch); assume 3.
HP = H // 2   # 14 (spatial after MaxPool2d(2, 2))
PIX = HP * HP            # 196 pooled pixels per channel
LANE = 256               # pooled-pixel axis lane-padded to 2 full vreg lanes
FLAT = C_OUT * PIX       # 3136
              # TODO(synk): reference Linear(1*14*14, 10) is inconsistent with the
              # 16-channel conv output; use the real flattened size 16*14*14.
N_CLS = 10
CK = C_OUT * N_CLS       # 160 (channel,class)-expanded linear output width


# ---------------------------------------------------------------------------
# Fused kernel: conv(3x3) + maxpool(2x2) + flatten + linear, single invocation.
#   xcol_ref : [9, N*4*256] bf16   im2col patches, lane = n*1024 + o*256 + p,
#              where p = 14*i+j (<196; lanes 196..255 are zero padding),
#              o = 2*oy+ox, tap row t = 3*ky+kx:
#              xcol[t, ...] = x_pad[n, 2*i+oy+ky, 2*j+ox+kx]
#   wc_ref   : [16, 9]  bf16       conv weight, wc[c, 3*ky+kx]
#   cb_ref   : [16, 1]  f32        conv bias
#   w2_ref   : [256, 160] bf16     w2[p, c*10+d] = lin_w[d, c*196+p] (0 for p>=196)
#   m_ref    : [16, 160] f32       channel-match mask, m[c', c*10+d] = (c'==c)
#   s_ref    : [160, 10] f32       class-fold selector, s[c*10+d, d'] = (d==d')
#   lb_ref   : [1, 10]  f32        linear bias
#   out_ref  : [N, 10]  f32
# ---------------------------------------------------------------------------
def fused_kernel(xcol_ref, wc_ref, cb_ref, w2_ref, m_ref, s_ref, lb_ref, out_ref):
    nb = out_ref.shape[0]

    # --- Conv: ONE MXU matmul over all batches & pool offsets -> [16, nb*1024].
    conv = jnp.dot(wc_ref[...], xcol_ref[...], preferred_element_type=jnp.float32)
    cb = cb_ref[...]          # [16, 1]  f32
    m = m_ref[...]            # [16, 160] f32

    # --- 2x2 max pool: 3 f32 maxes per batch on lane-aligned 256-wide slices.
    rows = []
    for b in range(nb):                       # static unroll (N=2)
        base = b * 4 * LANE
        p01 = jnp.maximum(conv[:, base:base + LANE],
                          conv[:, base + LANE:base + 2 * LANE])
        p23 = jnp.maximum(conv[:, base + 2 * LANE:base + 3 * LANE],
                          conv[:, base + 3 * LANE:base + 4 * LANE])
        rows.append(jnp.maximum(p01, p23) + cb)          # [16, 256] f32
    pooled = jnp.concatenate(rows, axis=0)               # [nb*16, 256] f32

    # --- Linear stage 1: one K=256 bf16 MXU dot against the expanded weight.
    #     g[n*16+c', c*10+d] = sum_p pooled[n][c', p] * lin_w[d, c*196+p]
    g = jnp.dot(pooled.astype(jnp.bfloat16), w2_ref[...],
                preferred_element_type=jnp.float32)      # [nb*16, 160] f32

    # --- Keep each channel's own class block (mask) and sum over channels.
    hs = [jnp.sum(g[b * C_OUT:(b + 1) * C_OUT, :] * m, axis=0, keepdims=True)
          for b in range(nb)]                            # each [1, 160]
    h = jnp.concatenate(hs, axis=0)                      # [nb, 160] f32

    # --- Linear stage 2: fold the 16 per-channel partial sums per class + bias.
    out_ref[...] = jnp.dot(h, s_ref[...],
                           preferred_element_type=jnp.float32) + lb_ref[...]


def fused_call(xcol, wc, cb, w2, mask, sel, lb, n):
    return pl.pallas_call(
        fused_kernel,
        out_shape=jax.ShapeDtypeStruct((n, N_CLS), jnp.float32),
        grid=(1,),
        in_specs=[
            pl.BlockSpec(xcol.shape, lambda i: (0, 0)),
            pl.BlockSpec(wc.shape, lambda i: (0, 0)),
            pl.BlockSpec(cb.shape, lambda i: (0, 0)),
            pl.BlockSpec(w2.shape, lambda i: (0, 0)),
            pl.BlockSpec(mask.shape, lambda i: (0, 0)),
            pl.BlockSpec(sel.shape, lambda i: (0, 0)),
            pl.BlockSpec(lb.shape, lambda i: (0, 0)),
        ],
        out_specs=pl.BlockSpec((n, N_CLS), lambda i: (0, 0)),
        compiler_params=pltpu.CompilerParams(dimension_semantics=("arbitrary",)),
    )(xcol, wc, cb, w2, mask, sel, lb)


def prepare_params(conv_w, conv_b, lin_w, lin_b):
    """One-time weight repacking, done OUTSIDE the jit (no per-call transposes)."""
    wc = conv_w[:, 0].reshape(C_OUT, KS * KS).astype(jnp.bfloat16)      # [16, 9]
    cb = conv_b.reshape(C_OUT, 1).astype(jnp.float32)                   # [16, 1]
    # w2[p, c*10+d] = lin_w[d, c*196 + p]; pooled-pixel rows padded 196 -> 256.
    w2 = lin_w.reshape(N_CLS, C_OUT, PIX).transpose(2, 1, 0).reshape(PIX, CK)
    w2 = jnp.pad(w2, ((0, LANE - PIX), (0, 0))).astype(jnp.bfloat16)    # [256,160]
    # Channel-match mask and class-fold selector (tiny constants, f32).
    mask = (jnp.arange(C_OUT)[:, None]
            == (jnp.arange(CK)[None, :] // N_CLS)).astype(jnp.float32)  # [16,160]
    sel = (jnp.arange(CK)[:, None] % N_CLS
           == jnp.arange(N_CLS)[None, :]).astype(jnp.float32)           # [160,10]
    lb = lin_b.reshape(1, N_CLS).astype(jnp.float32)                    # [1, 10]
    return wc, cb, w2, mask, sel, lb


@jax.jit
def testnet_forward(x, wc, cb, w2, mask, sel, lb):
    n = x.shape[0]
    # padding=1, cast to bf16, then emit the pool-deinterleaved im2col tensor
    # directly in the kernel's final lane-padded [9, N*4*256] layout.
    xp = jnp.pad(x[:, 0], ((0, 0), (1, 1), (1, 1))).astype(jnp.bfloat16)  # [N,30,30]
    taps = []
    for ky in range(KS):
        for kx in range(KS):
            offs = [xp[:, oy + ky:oy + ky + 2 * HP:2,
                       ox + kx:ox + kx + 2 * HP:2].reshape(n, PIX)       # [N,196]
                    for oy in range(2) for ox in range(2)]
            taps.append(jnp.stack(offs, axis=1))                         # [N,4,196]
    xcol = jnp.stack(taps, axis=0)                                       # [9,N,4,196]
    xcol = jnp.pad(xcol, ((0, 0), (0, 0), (0, 0), (0, LANE - PIX)))      # [9,N,4,256]
    xcol = xcol.reshape(KS * KS, n * 4 * LANE)                           # [9,N*1024]
    return fused_call(xcol, wc, cb, w2, mask, sel, lb, n)


if __name__ == "__main__":
    key = jax.random.PRNGKey(0)
    kx_, kw1, kb1, kw2, kb2 = jax.random.split(key, 5)
    x = jax.random.normal(kx_, (BATCH, 1, H, W), jnp.float32)
    conv_w = jax.random.normal(kw1, (C_OUT, 1, KS, KS), jnp.float32) * 0.1
    conv_b = jax.random.normal(kb1, (C_OUT,), jnp.float32) * 0.1
    lin_w = jax.random.normal(kw2, (N_CLS, FLAT), jnp.float32) * 0.02
    lin_b = jax.random.normal(kb2, (N_CLS,), jnp.float32) * 0.02

    params = prepare_params(conv_w, conv_b, lin_w, lin_b)
    out = jax.block_until_ready(testnet_forward(x, *params))
    assert out.shape == (BATCH, N_CLS) and out.dtype == jnp.float32

    # Pure-JAX f32 reference.  The kernel uses bf16 matmul operands with f32
    # accumulation, so the tolerance covers single-bf16-pass rounding.
    ref_conv = jax.lax.conv_general_dilated(
        x, conv_w, window_strides=(1, 1), padding=((1, 1), (1, 1)),
        dimension_numbers=("NCHW", "OIHW", "NCHW"),
        precision=jax.lax.Precision.HIGHEST)
    ref_conv = ref_conv + conv_b[None, :, None, None]
    ref_pool = jax.lax.reduce_window(ref_conv, -jnp.inf, jax.lax.max,
                                     (1, 1, 2, 2), (1, 1, 2, 2), "VALID")
    ref = jnp.dot(ref_pool.reshape(BATCH, -1), lin_w.T,
                  precision=jax.lax.Precision.HIGHEST) + lin_b

    if not jnp.allclose(out, ref, rtol=2e-2, atol=3e-2):
        raise AssertionError("Pallas output does not match JAX reference")
    print("KERNEL_OK")
</pallas_src>

<mosaic_0001>
module attributes {stable_mosaic.version = 11 : i64} {
  func.func @fused_kernel(%arg0: i32, %arg1: memref<9x2048xbf16, #tpu.memory_space<vmem>>, %arg2: memref<16x9xbf16, #tpu.memory_space<vmem>>, %arg3: memref<16x1xf32, #tpu.memory_space<vmem>>, %arg4: memref<256x160xbf16, #tpu.memory_space<vmem>>, %arg5: memref<16x160xf32, #tpu.memory_space<vmem>>, %arg6: memref<160x10xf32, #tpu.memory_space<vmem>>, %arg7: memref<1x10xf32, #tpu.memory_space<vmem>>, %arg8: memref<2x10xf32, #tpu.memory_space<vmem>>) attributes {dimension_semantics = [#tpu.dimension_semantics<arbitrary>], iteration_bounds = array<i64: 1>, scalar_prefetch = 0 : i64, scratch_operands = 0 : i64, tpu.core_type = #tpu.core_type<tc>, window_params = [{pipeline_mode = #tpu.pipeline_mode<synchronous>, transform_indices = @transform_0, window_bounds = array<i64: 9, 2048>}, {pipeline_mode = #tpu.pipeline_mode<synchronous>, transform_indices = @transform_1, window_bounds = array<i64: 16, 9>}, {pipeline_mode = #tpu.pipeline_mode<synchronous>, transform_indices = @transform_2, window_bounds = array<i64: 16, 1>}, {pipeline_mode = #tpu.pipeline_mode<synchronous>, transform_indices = @transform_3, window_bounds = array<i64: 256, 160>}, {pipeline_mode = #tpu.pipeline_mode<synchronous>, transform_indices = @transform_4, window_bounds = array<i64: 16, 160>}, {pipeline_mode = #tpu.pipeline_mode<synchronous>, transform_indices = @transform_5, window_bounds = array<i64: 160, 10>}, {pipeline_mode = #tpu.pipeline_mode<synchronous>, transform_indices = @transform_6, window_bounds = array<i64: 1, 10>}, {pipeline_mode = #tpu.pipeline_mode<synchronous>, transform_indices = @transform_7, window_bounds = array<i64: 2, 10>}]} {
    %c0 = arith.constant 0 : index
    %c0_0 = arith.constant 0 : index
    %0 = vector.load %arg2[%c0, %c0_0] : memref<16x9xbf16, #tpu.memory_space<vmem>>, vector<16x9xbf16>
    %c0_1 = arith.constant 0 : index
    %c0_2 = arith.constant 0 : index
    %1 = vector.load %arg1[%c0_1, %c0_2] : memref<9x2048xbf16, #tpu.memory_space<vmem>>, vector<9x2048xbf16>
    %cst = arith.constant dense<0.000000e+00> : vector<16x2048xf32>
    %2 = tpu.matmul %0, %1, %cst {dimension_numbers = #tpu.dot_dimension_numbers<[1], [0], [0], [1], [0, 0, 1, 1], [], []>} : vector<16x9xbf16>, vector<9x2048xbf16>, vector<16x2048xf32> -> vector<16x2048xf32>
    %c0_3 = arith.constant 0 : index
    %c0_4 = arith.constant 0 : index
    %3 = vector.load %arg3[%c0_3, %c0_4] : memref<16x1xf32, #tpu.memory_space<vmem>>, vector<16x1xf32>
    %c0_5 = arith.constant 0 : index
    %c0_6 = arith.constant 0 : index
    %4 = vector.load %arg5[%c0_5, %c0_6] : memref<16x160xf32, #tpu.memory_space<vmem>>, vector<16x160xf32>
    %5 = vector.extract_strided_slice %2 {offsets = [0, 0], sizes = [16, 256], strides = [1, 1]} : vector<16x2048xf32> to vector<16x256xf32>
    %6 = vector.extract_strided_slice %2 {offsets = [0, 256], sizes = [16, 256], strides = [1, 1]} : vector<16x2048xf32> to vector<16x256xf32>
    %7 = arith.maximumf %5, %6 : vector<16x256xf32>
    %8 = vector.extract_strided_slice %2 {offsets = [0, 512], sizes = [16, 256], strides = [1, 1]} : vector<16x2048xf32> to vector<16x256xf32>
    %9 = vector.extract_strided_slice %2 {offsets = [0, 768], sizes = [16, 256], strides = [1, 1]} : vector<16x2048xf32> to vector<16x256xf32>
    %10 = arith.maximumf %8, %9 : vector<16x256xf32>
    %11 = arith.maximumf %7, %10 : vector<16x256xf32>
    %12 = vector.broadcast %3 : vector<16x1xf32> to vector<16x256xf32>
    %13 = arith.addf %11, %12 : vector<16x256xf32>
    %14 = vector.extract_strided_slice %2 {offsets = [0, 1024], sizes = [16, 256], strides = [1, 1]} : vector<16x2048xf32> to vector<16x256xf32>
    %15 = vector.extract_strided_slice %2 {offsets = [0, 1280], sizes = [16, 256], strides = [1, 1]} : vector<16x2048xf32> to vector<16x256xf32>
    %16 = arith.maximumf %14, %15 : vector<16x256xf32>
    %17 = vector.extract_strided_slice %2 {offsets = [0, 1536], sizes = [16, 256], strides = [1, 1]} : vector<16x2048xf32> to vector<16x256xf32>
    %18 = vector.extract_strided_slice %2 {offsets = [0, 1792], sizes = [16, 256], strides = [1, 1]} : vector<16x2048xf32> to vector<16x256xf32>
    %19 = arith.maximumf %17, %18 : vector<16x256xf32>
    %20 = arith.maximumf %16, %19 : vector<16x256xf32>
    %21 = vector.broadcast %3 : vector<16x1xf32> to vector<16x256xf32>
    %22 = arith.addf %20, %21 : vector<16x256xf32>
    %23 = tpu.concatenate %13, %22 in 0 : vector<16x256xf32>, vector<16x256xf32> -> vector<32x256xf32>
    %24 = arith.truncf %23 : vector<32x256xf32> to vector<32x256xbf16>
    %c0_7 = arith.constant 0 : index
    %c0_8 = arith.constant 0 : index
    %25 = vector.load %arg4[%c0_7, %c0_8] : memref<256x160xbf16, #tpu.memory_space<vmem>>, vector<256x160xbf16>
    %cst_9 = arith.constant dense<0.000000e+00> : vector<32x160xf32>
    %26 = tpu.matmul %24, %25, %cst_9 {dimension_numbers = #tpu.dot_dimension_numbers<[1], [0], [0], [1], [0, 0, 1, 1], [], []>} : vector<32x256xbf16>, vector<256x160xbf16>, vector<32x160xf32> -> vector<32x160xf32>
    %27 = vector.extract_strided_slice %26 {offsets = [0, 0], sizes = [16, 160], strides = [1, 1]} : vector<32x160xf32> to vector<16x160xf32>
    %28 = arith.mulf %27, %4 : vector<16x160xf32>
    %cst_10 = arith.constant dense<0.000000e+00> : vector<160xf32>
    %29 = vector.multi_reduction <add>, %28, %cst_10 [0] : vector<16x160xf32> to vector<160xf32>
    %30 = vector.shape_cast %29 : vector<160xf32> to vector<1x160xf32>
    %31 = vector.extract_strided_slice %26 {offsets = [16, 0], sizes = [16, 160], strides = [1, 1]} : vector<32x160xf32> to vector<16x160xf32>
    %32 = arith.mulf %31, %4 : vector<16x160xf32>
    %cst_11 = arith.constant dense<0.000000e+00> : vector<160xf32>
    %33 = vector.multi_reduction <add>, %32, %cst_11 [0] : vector<16x160xf32> to vector<160xf32>
    %34 = vector.shape_cast %33 : vector<160xf32> to vector<1x160xf32>
    %35 = tpu.concatenate %30, %34 in 0 : vector<1x160xf32>, vector<1x160xf32> -> vector<2x160xf32>
    %c0_12 = arith.constant 0 : index
    %c0_13 = arith.constant 0 : index
    %36 = vector.load %arg6[%c0_12, %c0_13] : memref<160x10xf32, #tpu.memory_space<vmem>>, vector<160x10xf32>
    %cst_14 = arith.constant dense<0.000000e+00> : vector<2x10xf32>
    %37 = tpu.matmul %35, %36, %cst_14 {dimension_numbers = #tpu.dot_dimension_numbers<[1], [0], [0], [1], [0, 0, 1, 1], [], []>} : vector<2x160xf32>, vector<160x10xf32>, vector<2x10xf32> -> vector<2x10xf32>
    %c0_15 = arith.constant 0 : index
    %c0_16 = arith.constant 0 : index
    %38 = vector.load %arg7[%c0_15, %c0_16] : memref<1x10xf32, #tpu.memory_space<vmem>>, vector<1x10xf32>
    %39 = vector.broadcast %38 : vector<1x10xf32> to vector<2x10xf32>
    %40 = arith.addf %37, %39 : vector<2x10xf32>
    %c0_17 = arith.constant 0 : index
    %c0_18 = arith.constant 0 : index
    %41 = vector.load %arg8[%c0_17, %c0_18] : memref<2x10xf32, #tpu.memory_space<vmem>>, vector<2x10xf32>
    tpu.vector_store %arg8[%c0_17, %c0_18], %40 {strides = array<i32>} : memref<2x10xf32, #tpu.memory_space<vmem>>, vector<2x10xf32>,
    return
  }
  func.func @transform_0(%arg0: i32) -> (i32, i32) {
    %c0_i32 = arith.constant 0 : i32
    %c0_i32_0 = arith.constant 0 : i32
    %c0_i32_1 = arith.constant 0 : i32
    return %c0_i32, %c0_i32_0 : i32, i32
  }
  func.func @transform_1(%arg0: i32) -> (i32, i32) {
    %c0_i32 = arith.constant 0 : i32
    %c0_i32_0 = arith.constant 0 : i32
    %c0_i32_1 = arith.constant 0 : i32
    return %c0_i32, %c0_i32_0 : i32, i32
  }
  func.func @transform_2(%arg0: i32) -> (i32, i32) {
    %c0_i32 = arith.constant 0 : i32
    %c0_i32_0 = arith.constant 0 : i32
    %c0_i32_1 = arith.constant 0 : i32
    return %c0_i32, %c0_i32_0 : i32, i32
  }
  func.func @transform_3(%arg0: i32) -> (i32, i32) {
    %c0_i32 = arith.constant 0 : i32
    %c0_i32_0 = arith.constant 0 : i32
    %c0_i32_1 = arith.constant 0 : i32
    return %c0_i32, %c0_i32_0 : i32, i32
  }
  func.func @transform_4(%arg0: i32) -> (i32, i32) {
    %c0_i32 = arith.constant 0 : i32
    %c0_i32_0 = arith.constant 0 : i32
    %c0_i32_1 = arith.constant 0 : i32
    return %c0_i32, %c0_i32_0 : i32, i32
  }
  func.func @transform_5(%arg0: i32) -> (i32, i32) {
    %c0_i32 = arith.constant 0 : i32
    %c0_i32_0 = arith.constant 0 : i32
    %c0_i32_1 = arith.constant 0 : i32
    return %c0_i32, %c0_i32_0 : i32, i32
  }
  func.func @transform_6(%arg0: i32) -> (i32, i32) {
    %c0_i32 = arith.constant 0 : i32
    %c0_i32_0 = arith.constant 0 : i32
    %c0_i32_1 = arith.constant 0 : i32
    return %c0_i32, %c0_i32_0 : i32, i32
  }
  func.func @transform_7(%arg0: i32) -> (i32, i32) {
    %c0_i32 = arith.constant 0 : i32
    %c0_i32_0 = arith.constant 0 : i32
    %c0_i32_1 = arith.constant 0 : i32
    return %c0_i32, %c0_i32_0 : i32, i32
  }
}

</mosaic_0001>

<llo_original>
// kernel: testnet_forward.1
$region0: #{testnet_forward.1}
  #allocation0 [shape = 'u32[]', space=smem, size = 0x4, offset = 0x4, fixed_abs, tag = 'smem constant byte address 0x4 - core index']
  #allocation1 [shape = 'u32[144,128]{1,0:T(1,128)}', space=vmem, size = 0x12000, scoped, tag = 'internal scratch']
  %s0 = inlined_call_operand.vmem [shape: bf16[9,2048], index: 0, kind: input, shape index: {}]
  %s1 = inlined_call_operand.vmem [shape: bf16[16,9], index: 1, kind: input, shape index: {}]
  %s2 = inlined_call_operand.vmem [shape: f32[16,1], index: 2, kind: input, shape index: {}]
  %s3 = inlined_call_operand.vmem [shape: bf16[256,160], index: 3, kind: input, shape index: {}]
  %s4 = inlined_call_operand.vmem [shape: f32[16,160], index: 4, kind: input, shape index: {}]
  %s5 = inlined_call_operand.vmem [shape: f32[160,10], index: 5, kind: input, shape index: {}]
  %s6 = inlined_call_operand.vmem [shape: f32[1,10], index: 6, kind: input, shape index: {}]
  %s7 = inlined_call_operand.hbm [shape: f32[2,10], index: 7, kind: output, shape index: {}]
  %s8 = sld [smem:[#allocation0]]
  $region38: #{testnet_forward.1} parent=0
    _
  %s10 = ssub.s32 1, %s8
  %s11 = scalar_select 0, %s10, %s8
  $region1: #{testnet_forward.1} parent=0
    #allocation2 [shape = 'u8[1024]{0}', space=vmem, size = 0x400, scoped, tag = 'output window, operand 0, single buffered']
    #allocation3 [shape = 's32[1]{0}', space=sflag, size = 0x4, scoped, tag = 'scoped memory for testnet_forward.1']
    %12 = vsyncpa [#allocation3], 0
    // Predicated region
    $region2: #{testnet_forward.1} parent=1 // pred_check
      _
    $region3: #{testnet_forward.1} parent=1 // pred_check_branch
      %14 = sbr.rel (0) target = $region5
    $region4: #{testnet_forward.1} parent=1 // pred_region
      _
    $region5: #{testnet_forward.1} parent=1 // pred_fallthru
      _
    // Predicated region
    $region6: #{testnet_forward.1} parent=1 // pred_check
      _
    $region7: #{testnet_forward.1} parent=1 // pred_check_branch
      %16 = sbr.rel (0) target = $region9
    $region8: #{testnet_forward.1} parent=1 // pred_region
      _
    $region9: #{testnet_forward.1} parent=1 // pred_fallthru
      _
    // Predicated region
    $region10: #{testnet_forward.1} parent=1 // pred_check
      _
    $region11: #{testnet_forward.1} parent=1 // pred_check_branch
      %18 = sbr.rel (0) target = $region13
    $region12: #{testnet_forward.1} parent=1 // pred_region
      _
    $region13: #{testnet_forward.1} parent=1 // pred_fallthru
      _
    // Predicated region
    $region14: #{testnet_forward.1} parent=1 // pred_check
      _
    $region15: #{testnet_forward.1} parent=1 // pred_check_branch
      %20 = sbr.rel (0) target = $region17
    $region16: #{testnet_forward.1} parent=1 // pred_region
      _
    $region17: #{testnet_forward.1} parent=1 // pred_fallthru
      _
    // Predicated region
    $region18: #{testnet_forward.1} parent=1 // pred_check
      _
    $region19: #{testnet_forward.1} parent=1 // pred_check_branch
      %22 = sbr.rel (0) target = $region21
    $region20: #{testnet_forward.1} parent=1 // pred_region
      _
    $region21: #{testnet_forward.1} parent=1 // pred_fallthru
      _
    // Predicated region
    $region22: #{testnet_forward.1} parent=1 // pred_check
      _
    $region23: #{testnet_forward.1} parent=1 // pred_check_branch
      %24 = sbr.rel (0) target = $region25
    $region24: #{testnet_forward.1} parent=1 // pred_region
      _
    $region25: #{testnet_forward.1} parent=1 // pred_fallthru
      _
    // Predicated region
    $region26: #{testnet_forward.1} parent=1 // pred_check
      _
    $region27: #{testnet_forward.1} parent=1 // pred_check_branch
      %26 = sbr.rel (0) target = $region29
    $region28: #{testnet_forward.1} parent=1 // pred_region
      _
    $region29: #{testnet_forward.1} parent=1 // pred_fallthru
      _
    %v28 = vld [vmem:[%s1] sm:$0xf]
    %v29 = vld [vmem:[%s1 + $0x4] sm:$0xf]
    %v30 = vld [vmem:[%s0] sm:$0xff]
    %v31 = vld [vmem:[%s0 + $0x8] sm:$0xff]
    %v32 = vld [vmem:[%s0 + $0x10] sm:$0xff]
    %v33 = vld [vmem:[%s0 + $0x18] sm:$0xff]
    %v34 = vld [vmem:[%s0 + $0x20] sm:$0xff]
    %v35 = vld [vmem:[%s0 + $0x28] sm:$0xff]
    %v36 = vld [vmem:[%s0 + $0x30] sm:$0xff]
    %v37 = vld [vmem:[%s0 + $0x38] sm:$0xff]
    %v38 = vld [vmem:[%s0 + $0x40] sm:$0x11]
    %v39 = vld [vmem:[%s0 + $0x48] sm:$0x11]
    %v40 = vld [vmem:[%s0 + $0x50] sm:$0x11]
    %v41 = vld [vmem:[%s0 + $0x58] sm:$0x11]
    %v42 = vld [vmem:[%s0 + $0x60] sm:$0x11]
    %v43 = vld [vmem:[%s0 + $0x68] sm:$0x11]
    %v44 = vld [vmem:[%s0 + $0x70] sm:$0x11]
    %v45 = vld [vmem:[%s0 + $0x78] sm:$0x11]
    %v48 = vunpack.c.l.b16 %v28
    %v49 = vunpack.c.l.b16 %v29
    %v50 = vpack.c.b16 %v49, %v48
    %v67 = vunpack.c.l.b16 %v30
    %v68 = vunpack.c.h.b16 %v30
    %v69 = vunpack.c.l.b16 %v31
    %v70 = vunpack.c.h.b16 %v31
    %v71 = vunpack.c.l.b16 %v32
    %v72 = vunpack.c.h.b16 %v32
    %v73 = vunpack.c.l.b16 %v33
    %v74 = vunpack.c.h.b16 %v33
    %v75 = vunpack.c.l.b16 %v34
    %v76 = vunpack.c.h.b16 %v34
    %v77 = vunpack.c.l.b16 %v35
    %v78 = vunpack.c.h.b16 %v35
    %v79 = vunpack.c.l.b16 %v36
    %v80 = vunpack.c.h.b16 %v36
    %v81 = vunpack.c.l.b16 %v37
    %v82 = vunpack.c.h.b16 %v37
    %v83 = vunpack.c.l.b16 %v38
    %v84 = vunpack.c.h.b16 %v38
    %v85 = vunpack.c.l.b16 %v39
    %v86 = vunpack.c.h.b16 %v39
    %v87 = vunpack.c.l.b16 %v40
    %v88 = vunpack.c.h.b16 %v40
    %v89 = vunpack.c.l.b16 %v41
    %v90 = vunpack.c.h.b16 %v41
    %v91 = vunpack.c.l.b16 %v42
    %v92 = vunpack.c.h.b16 %v42
    %v93 = vunpack.c.l.b16 %v43
    %v94 = vunpack.c.h.b16 %v43
    %v95 = vunpack.c.l.b16 %v44
    %v96 = vunpack.c.h.b16 %v44
    %v97 = vunpack.c.l.b16 %v45
    %v98 = vunpack.c.h.b16 %v45
    %v99 = vpack.c.b16 %v83, %v67
    %v100 = vpack.c.b16 %v84, %v68
    %v101 = vpack.c.b16 %v85, %v69
    %v102 = vpack.c.b16 %v86, %v70
    %v103 = vpack.c.b16 %v87, %v71
    %v104 = vpack.c.b16 %v88, %v72
    %v105 = vpack.c.b16 %v89, %v73
    %v106 = vpack.c.b16 %v90, %v74
    %v107 = vpack.c.b16 %v91, %v75
    %v108 = vpack.c.b16 %v92, %v76
    %v109 = vpack.c.b16 %v93, %v77
    %v110 = vpack.c.b16 %v94, %v78
    %v111 = vpack.c.b16 %v95, %v79
    %v112 = vpack.c.b16 %v96, %v80
    %v113 = vpack.c.b16 %v97, %v81
    %v114 = vpack.c.b16 %v98, %v82
    %vm115 = vcmask 72704
    %v117 = vsel %vm115, %v50, 0
    %vm119 = vcmask 1043456
    %vm120 = vcmask 1044480
    %v121 = vsel %vm119, 4294967295, 65535
    %v122 = vsel %vm120, %v121, 0
    %v124 = vand.u32 %v99, %v122
    %v127 = vand.u32 %v100, %v122
    %v130 = vand.u32 %v101, %v122
    %v133 = vand.u32 %v102, %v122
    %v136 = vand.u32 %v103, %v122
    %v139 = vand.u32 %v104, %v122
    %v142 = vand.u32 %v105, %v122
    %v145 = vand.u32 %v106, %v122
    %v148 = vand.u32 %v107, %v122
    %v151 = vand.u32 %v108, %v122
    %v154 = vand.u32 %v109, %v122
    %v157 = vand.u32 %v110, %v122
    %v160 = vand.u32 %v111, %v122
    %v163 = vand.u32 %v112, %v122
    %v166 = vand.u32 %v113, %v122
    %v169 = vand.u32 %v114, %v122
    %171 = vmatprep.subr.bf16.mxu0 %v127
    %172 = vmatpush1.bf16.msra.mxu0 %v124
    %173 = vmatprep.subr.bf16.mxu0 0
    %174 = vmatpush1.bf16.msra.mxu0 0
    %175 = vmatprep.subr.bf16.mxu0 0
    %176 = vmatpush1.bf16.msra.mxu0 0
    %177 = vmatprep.subr.bf16.mxu0 0
    %178 = vmatpush1.bf16.msra.mxu0 0
    %179 = vmatprep.subr.bf16.mxu0 0
    %180 = vmatpush1.bf16.msra.mxu0 0
    %181 = vmatprep.subr.bf16.mxu0 0
    %182 = vmatpush1.bf16.msra.mxu0 0
    %183 = vmatprep.subr.bf16.mxu0 0
    %184 = vmatpush1.bf16.msra.mxu0 0
    %185 = vmatprep.subr.bf16.mxu0 0
    %186 = vmatpush1.bf16.msra.mxu0 0
    %187 = vmatprep.subr.bf16.mxu0 0
    %188 = vmatpush1.bf16.msra.mxu0 0
    %189 = vmatprep.subr.bf16.mxu0 0
    %190 = vmatpush1.bf16.msra.mxu0 0
    %191 = vmatprep.subr.bf16.mxu0 0
    %192 = vmatpush1.bf16.msra.mxu0 0
    %193 = vmatprep.subr.bf16.mxu0 0
    %194 = vmatpush1.bf16.msra.mxu0 0
    %195 = vmatprep.subr.bf16.mxu0 0
    %196 = vmatpush1.bf16.msra.mxu0 0
    %197 = vmatprep.subr.bf16.mxu0 0
    %198 = vmatpush1.bf16.msra.mxu0 0
    %199 = vmatprep.subr.bf16.mxu0 0
    %200 = vmatpush1.bf16.msra.mxu0 0
    %201 = vmatprep.subr.bf16.mxu0 0
    %202 = vmatpush1.bf16.msra.mxu0 0
    %203 = vmatprep.mubr.bf16.mxu0 0
    %204 = vmatmul.mubr.bf16.gmra.mrb[0].mxu0 %v117
    %v205 = vpop.f32.mrb[0].mxu0
    %v206 = vadd.f32 0.0, %v205
    %v207 = vpop.f32.mrb[0].mxu0
    %v208 = vadd.f32 0.0, %v207
    %v209 = vpop.f32.mrb[0].mxu0
    %v210 = vadd.f32 0.0, %v209
    %v211 = vpop.f32.mrb[0].mxu0
    %v212 = vadd.f32 0.0, %v211
    %213 = vdwg.mxu0
    %214 = vmatprep.subr.bf16.mxu0 %v133
    %215 = vmatpush1.bf16.msra.mxu0 %v130
    %216 = vmatprep.subr.bf16.mxu0 0
    %217 = vmatpush1.bf16.msra.mxu0 0
    %218 = vmatprep.subr.bf16.mxu0 0
    %219 = vmatpush1.bf16.msra.mxu0 0
    %220 = vmatprep.subr.bf16.mxu0 0
    %221 = vmatpush1.bf16.msra.mxu0 0
    %222 = vmatprep.subr.bf16.mxu0 0
    %223 = vmatpush1.bf16.msra.mxu0 0
    %224 = vmatprep.subr.bf16.mxu0 0
    %225 = vmatpush1.bf16.msra.mxu0 0
    %226 = vmatprep.subr.bf16.mxu0 0
    %227 = vmatpush1.bf16.msra.mxu0 0
    %228 = vmatprep.subr.bf16.mxu0 0
    %229 = vmatpush1.bf16.msra.mxu0 0
    %230 = vmatprep.subr.bf16.mxu0 0
    %231 = vmatpush1.bf16.msra.mxu0 0
    %232 = vmatprep.subr.bf16.mxu0 0
    %233 = vmatpush1.bf16.msra.mxu0 0
    %234 = vmatprep.subr.bf16.mxu0 0
    %235 = vmatpush1.bf16.msra.mxu0 0
    %236 = vmatprep.subr.bf16.mxu0 0
    %237 = vmatpush1.bf16.msra.mxu0 0
    %238 = vmatprep.subr.bf16.mxu0 0
    %239 = vmatpush1.bf16.msra.mxu0 0
    %240 = vmatprep.subr.bf16.mxu0 0
    %241 = vmatpush1.bf16.msra.mxu0 0
    %242 = vmatprep.subr.bf16.mxu0 0
    %243 = vmatpush1.bf16.msra.mxu0 0
    %244 = vmatprep.subr.bf16.mxu0 0
    %245 = vmatpush1.bf16.msra.mxu0 0
    %246 = vmatprep.mubr.bf16.mxu0 0
    %247 = vmatmul.mubr.bf16.gmra.mrb[0].mxu0 %v117
    %v248 = vpop.f32.mrb[0].mxu0
    %v249 = vadd.f32 0.0, %v248
    %v250 = vpop.f32.mrb[0].mxu0
    %v251 = vadd.f32 0.0, %v250
    %v252 = vpop.f32.mrb[0].mxu0
    %v253 = vadd.f32 0.0, %v252
    %v254 = vpop.f32.mrb[0].mxu0
    %v255 = vadd.f32 0.0, %v254
    %256 = vdwg.mxu0
    %257 = vmatprep.subr.bf16.mxu0 %v139
    %258 = vmatpush1.bf16.msra.mxu0 %v136
    %259 = vmatprep.subr.bf16.mxu0 0
    %260 = vmatpush1.bf16.msra.mxu0 0
    %261 = vmatprep.subr.bf16.mxu0 0
    %262 = vmatpush1.bf16.msra.mxu0 0
    %263 = vmatprep.subr.bf16.mxu0 0
    %264 = vmatpush1.bf16.msra.mxu0 0
    %265 = vmatprep.subr.bf16.mxu0 0
    %266 = vmatpush1.bf16.msra.mxu0 0
    %267 = vmatprep.subr.bf16.mxu0 0
    %268 = vmatpush1.bf16.msra.mxu0 0
    %269 = vmatprep.subr.bf16.mxu0 0
    %270 = vmatpush1.bf16.msra.mxu0 0
    %271 = vmatprep.subr.bf16.mxu0 0
    %272 = vmatpush1.bf16.msra.mxu0 0
    %273 = vmatprep.subr.bf16.mxu0 0
    %274 = vmatpush1.bf16.msra.mxu0 0
    %275 = vmatprep.subr.bf16.mxu0 0
    %276 = vmatpush1.bf16.msra.mxu0 0
    %277 = vmatprep.subr.bf16.mxu0 0
    %278 = vmatpush1.bf16.msra.mxu0 0
    %279 = vmatprep.subr.bf16.mxu0 0
    %280 = vmatpush1.bf16.msra.mxu0 0
    %281 = vmatprep.subr.bf16.mxu0 0
    %282 = vmatpush1.bf16.msra.mxu0 0
    %283 = vmatprep.subr.bf16.mxu0 0
    %284 = vmatpush1.bf16.msra.mxu0 0
    %285 = vmatprep.subr.bf16.mxu0 0
    %286 = vmatpush1.bf16.msra.mxu0 0
    %287 = vmatprep.subr.bf16.mxu0 0
    %288 = vmatpush1.bf16.msra.mxu0 0
    %289 = vmatprep.mubr.bf16.mxu0 0
    %290 = vmatmul.mubr.bf16.gmra.mrb[0].mxu0 %v117
    %v291 = vpop.f32.mrb[0].mxu0
    %v292 = vadd.f32 0.0, %v291
    %v293 = vpop.f32.mrb[0].mxu0
    %v294 = vadd.f32 0.0, %v293
    %v295 = vpop.f32.mrb[0].mxu0
    %v296 = vadd.f32 0.0, %v295
    %v297 = vpop.f32.mrb[0].mxu0
    %v298 = vadd.f32 0.0, %v297
    %299 = vdwg.mxu0
    %300 = vmatprep.subr.bf16.mxu0 %v145
    %301 = vmatpush1.bf16.msra.mxu0 %v142
    %302 = vmatprep.subr.bf16.mxu0 0
    %303 = vmatpush1.bf16.msra.mxu0 0
    %304 = vmatprep.subr.bf16.mxu0 0
    %305 = vmatpush1.bf16.msra.mxu0 0
    %306 = vmatprep.subr.bf16.mxu0 0
    %307 = vmatpush1.bf16.msra.mxu0 0
    %308 = vmatprep.subr.bf16.mxu0 0
    %309 = vmatpush1.bf16.msra.mxu0 0
    %310 = vmatprep.subr.bf16.mxu0 0
    %311 = vmatpush1.bf16.msra.mxu0 0
    %312 = vmatprep.subr.bf16.mxu0 0
    %313 = vmatpush1.bf16.msra.mxu0 0
    %314 = vmatprep.subr.bf16.mxu0 0
    %315 = vmatpush1.bf16.msra.mxu0 0
    %316 = vmatprep.subr.bf16.mxu0 0
    %317 = vmatpush1.bf16.msra.mxu0 0
    %318 = vmatprep.subr.bf16.mxu0 0
    %319 = vmatpush1.bf16.msra.mxu0 0
    %320 = vmatprep.subr.bf16.mxu0 0
    %321 = vmatpush1.bf16.msra.mxu0 0
    %322 = vmatprep.subr.bf16.mxu0 0
    %323 = vmatpush1.bf16.msra.mxu0 0
    %324 = vmatprep.subr.bf16.mxu0 0
    %325 = vmatpush1.bf16.msra.mxu0 0
    %326 = vmatprep.subr.bf16.mxu0 0
    %327 = vmatpush1.bf16.msra.mxu0 0
    %328 = vmatprep.subr.bf16.mxu0 0
    %329 = vmatpush1.bf16.msra.mxu0 0
    %330 = vmatprep.subr.bf16.mxu0 0
    %331 = vmatpush1.bf16.msra.mxu0 0
    %332 = vmatprep.mubr.bf16.mxu0 0
    %333 = vmatmul.mubr.bf16.gmra.mrb[0].mxu0 %v117
    %v334 = vpop.f32.mrb[0].mxu0
    %v335 = vadd.f32 0.0, %v334
    %v336 = vpop.f32.mrb[0].mxu0
    %v337 = vadd.f32 0.0, %v336
    %v338 = vpop.f32.mrb[0].mxu0
    %v339 = vadd.f32 0.0, %v338
    %v340 = vpop.f32.mrb[0].mxu0
    %v341 = vadd.f32 0.0, %v340
    %342 = vdwg.mxu0
    %343 = vmatprep.subr.bf16.mxu0 %v151
    %344 = vmatpush1.bf16.msra.mxu0 %v148
    %345 = vmatprep.subr.bf16.mxu0 0
    %346 = vmatpush1.bf16.msra.mxu0 0
    %347 = vmatprep.subr.bf16.mxu0 0
    %348 = vmatpush1.bf16.msra.mxu0 0
    %349 = vmatprep.subr.bf16.mxu0 0
    %350 = vmatpush1.bf16.msra.mxu0 0
    %351 = vmatprep.subr.bf16.mxu0 0
    %352 = vmatpush1.bf16.msra.mxu0 0
    %353 = vmatprep.subr.bf16.mxu0 0
    %354 = vmatpush1.bf16.msra.mxu0 0
    %355 = vmatprep.subr.bf16.mxu0 0
    %356 = vmatpush1.bf16.msra.mxu0 0
    %357 = vmatprep.subr.bf16.mxu0 0
    %358 = vmatpush1.bf16.msra.mxu0 0
    %359 = vmatprep.subr.bf16.mxu0 0
    %360 = vmatpush1.bf16.msra.mxu0 0
    %361 = vmatprep.subr.bf16.mxu0 0
    %362 = vmatpush1.bf16.msra.mxu0 0
    %363 = vmatprep.subr.bf16.mxu0 0
    %364 = vmatpush1.bf16.msra.mxu0 0
    %365 = vmatprep.subr.bf16.mxu0 0
    %366 = vmatpush1.bf16.msra.mxu0 0
    %367 = vmatprep.subr.bf16.mxu0 0
    %368 = vmatpush1.bf16.msra.mxu0 0
    %369 = vmatprep.subr.bf16.mxu0 0
    %370 = vmatpush1.bf16.msra.mxu0 0
    %371 = vmatprep.subr.bf16.mxu0 0
    %372 = vmatpush1.bf16.msra.mxu0 0
    %373 = vmatprep.subr.bf16.mxu0 0
    %374 = vmatpush1.bf16.msra.mxu0 0
    %375 = vmatprep.mubr.bf16.mxu0 0
    %376 = vmatmul.mubr.bf16.gmra.mrb[0].mxu0 %v117
    %v377 = vpop.f32.mrb[0].mxu0
    %v378 = vadd.f32 0.0, %v377
    %v379 = vpop.f32.mrb[0].mxu0
    %v380 = vadd.f32 0.0, %v379
    %v381 = vpop.f32.mrb[0].mxu0
    %v382 = vadd.f32 0.0, %v381
    %v383 = vpop.f32.mrb[0].mxu0
    %v384 = vadd.f32 0.0, %v383
    %385 = vdwg.mxu0
    %386 = vmatprep.subr.bf16.mxu0 %v157
    %387 = vmatpush1.bf16.msra.mxu0 %v154
    %388 = vmatprep.subr.bf16.mxu0 0
    %389 = vmatpush1.bf16.msra.mxu0 0
    %390 = vmatprep.subr.bf16.mxu0 0
    %391 = vmatpush1.bf16.msra.mxu0 0
    %392 = vmatprep.subr.bf16.mxu0 0
    %393 = vmatpush1.bf16.msra.mxu0 0
    %394 = vmatprep.subr.bf16.mxu0 0
    %395 = vmatpush1.bf16.msra.mxu0 0
    %396 = vmatprep.subr.bf16.mxu0 0
    %397 = vmatpush1.bf16.msra.mxu0 0
    %398 = vmatprep.subr.bf16.mxu0 0
    %399 = vmatpush1.bf16.msra.mxu0 0
    %400 = vmatprep.subr.bf16.mxu0 0
    %401 = vmatpush1.bf16.msra.mxu0 0
    %402 = vmatprep.subr.bf16.mxu0 0
    %403 = vmatpush1.bf16.msra.mxu0 0
    %404 = vmatprep.subr.bf16.mxu0 0
    %405 = vmatpush1.bf16.msra.mxu0 0
    %406 = vmatprep.subr.bf16.mxu0 0
    %407 = vmatpush1.bf16.msra.mxu0 0
    %408 = vmatprep.subr.bf16.mxu0 0
    %409 = vmatpush1.bf16.msra.mxu0 0
    %410 = vmatprep.subr.bf16.mxu0 0
    %411 = vmatpush1.bf16.msra.mxu0 0
    %412 = vmatprep.subr.bf16.mxu0 0
    %413 = vmatpush1.bf16.msra.mxu0 0
    %414 = vmatprep.subr.bf16.mxu0 0
    %415 = vmatpush1.bf16.msra.mxu0 0
    %416 = vmatprep.subr.bf16.mxu0 0
    %417 = vmatpush1.bf16.msra.mxu0 0
    %418 = vmatprep.mubr.bf16.mxu0 0
    %419 = vmatmul.mubr.bf16.gmra.mrb[0].mxu0 %v117
    %v420 = vpop.f32.mrb[0].mxu0
    %v421 = vadd.f32 0.0, %v420
    %v422 = vpop.f32.mrb[0].mxu0
    %v423 = vadd.f32 0.0, %v422
    %v424 = vpop.f32.mrb[0].mxu0
    %v425 = vadd.f32 0.0, %v424
    %v426 = vpop.f32.mrb[0].mxu0
    %v427 = vadd.f32 0.0, %v426
    %428 = vdwg.mxu0
    %429 = vmatprep.subr.bf16.mxu0 %v163
    %430 = vmatpush1.bf16.msra.mxu0 %v160
    %431 = vmatprep.subr.bf16.mxu0 0
    %432 = vmatpush1.bf16.msra.mxu0 0
    %433 = vmatprep.subr.bf16.mxu0 0
    %434 = vmatpush1.bf16.msra.mxu0 0
    %435 = vmatprep.subr.bf16.mxu0 0
    %436 = vmatpush1.bf16.msra.mxu0 0
    %437 = vmatprep.subr.bf16.mxu0 0
    %438 = vmatpush1.bf16.msra.mxu0 0
    %439 = vmatprep.subr.bf16.mxu0 0
    %440 = vmatpush1.bf16.msra.mxu0 0
    %441 = vmatprep.subr.bf16.mxu0 0
    %442 = vmatpush1.bf16.msra.mxu0 0
    %443 = vmatprep.subr.bf16.mxu0 0
    %444 = vmatpush1.bf16.msra.mxu0 0
    %445 = vmatprep.subr.bf16.mxu0 0
    %446 = vmatpush1.bf16.msra.mxu0 0
    %447 = vmatprep.subr.bf16.mxu0 0
    %448 = vmatpush1.bf16.msra.mxu0 0
    %449 = vmatprep.subr.bf16.mxu0 0
    %450 = vmatpush1.bf16.msra.mxu0 0
    %451 = vmatprep.subr.bf16.mxu0 0
    %452 = vmatpush1.bf16.msra.mxu0 0
    %453 = vmatprep.subr.bf16.mxu0 0
    %454 = vmatpush1.bf16.msra.mxu0 0
    %455 = vmatprep.subr.bf16.mxu0 0
    %456 = vmatpush1.bf16.msra.mxu0 0
    %457 = vmatprep.subr.bf16.mxu0 0
    %458 = vmatpush1.bf16.msra.mxu0 0
    %459 = vmatprep.subr.bf16.mxu0 0
    %460 = vmatpush1.bf16.msra.mxu0 0
    %461 = vmatprep.mubr.bf16.mxu0 0
    %462 = vmatmul.mubr.bf16.gmra.mrb[0].mxu0 %v117
    %v463 = vpop.f32.mrb[0].mxu0
    %v464 = vadd.f32 0.0, %v463
    %v465 = vpop.f32.mrb[0].mxu0
    %v466 = vadd.f32 0.0, %v465
    %v467 = vpop.f32.mrb[0].mxu0
    %v468 = vadd.f32 0.0, %v467
    %v469 = vpop.f32.mrb[0].mxu0
    %v470 = vadd.f32 0.0, %v469
    %471 = vdwg.mxu0
    %472 = vmatprep.subr.bf16.mxu0 %v169
    %473 = vmatpush1.bf16.msra.mxu0 %v166
    %474 = vmatprep.subr.bf16.mxu0 0
    %475 = vmatpush1.bf16.msra.mxu0 0
    %476 = vmatprep.subr.bf16.mxu0 0
    %477 = vmatpush1.bf16.msra.mxu0 0
    %478 = vmatprep.subr.bf16.mxu0 0
    %479 = vmatpush1.bf16.msra.mxu0 0
    %480 = vmatprep.subr.bf16.mxu0 0
    %481 = vmatpush1.bf16.msra.mxu0 0
    %482 = vmatprep.subr.bf16.mxu0 0
    %483 = vmatpush1.bf16.msra.mxu0 0
    %484 = vmatprep.subr.bf16.mxu0 0
    %485 = vmatpush1.bf16.msra.mxu0 0
    %486 = vmatprep.subr.bf16.mxu0 0
    %487 = vmatpush1.bf16.msra.mxu0 0
    %488 = vmatprep.subr.bf16.mxu0 0
    %489 = vmatpush1.bf16.msra.mxu0 0
    %490 = vmatprep.subr.bf16.mxu0 0
    %491 = vmatpush1.bf16.msra.mxu0 0
    %492 = vmatprep.subr.bf16.mxu0 0
    %493 = vmatpush1.bf16.msra.mxu0 0
    %494 = vmatprep.subr.bf16.mxu0 0
    %495 = vmatpush1.bf16.msra.mxu0 0
    %496 = vmatprep.subr.bf16.mxu0 0
    %497 = vmatpush1.bf16.msra.mxu0 0
    %498 = vmatprep.subr.bf16.mxu0 0
    %499 = vmatpush1.bf16.msra.mxu0 0
    %500 = vmatprep.subr.bf16.mxu0 0
    %501 = vmatpush1.bf16.msra.mxu0 0
    %502 = vmatprep.subr.bf16.mxu0 0
    %503 = vmatpush1.bf16.msra.mxu0 0
    %504 = vmatprep.mubr.bf16.mxu0 0
    %505 = vmatmul.mubr.bf16.gmra.mrb[0].mxu0 %v117
    %v506 = vpop.f32.mrb[0].mxu0
    %v507 = vadd.f32 0.0, %v506
    %v508 = vpop.f32.mrb[0].mxu0
    %v509 = vadd.f32 0.0, %v508
    %v510 = vpop.f32.mrb[0].mxu0
    %v511 = vadd.f32 0.0, %v510
    %v512 = vpop.f32.mrb[0].mxu0
    %v513 = vadd.f32 0.0, %v512
    %514 = vdwg.mxu0
    %v515 = vld [vmem:[%s2] sm:$0xff]
    %v516 = vld [vmem:[%s2 + $0x8] sm:$0xff]
    %v517 = vld [vmem:[%s4] sm:$0xff]
    %v518 = vld [vmem:[%s4 + $0x8] sm:$0xff]
    %v519 = vld [vmem:[%s4 + $0x10] sm:$0xff]
    %v520 = vld [vmem:[%s4 + $0x18] sm:$0xff]
    %v521 = vmax.f32 %v206, %v249
    %v522 = vmax.f32 %v208, %v251
    %v523 = vmax.f32 %v210, %v253
    %v524 = vmax.f32 %v212, %v255
    %v525 = vmax.f32 %v292, %v335
    %v526 = vmax.f32 %v294, %v337
    %v527 = vmax.f32 %v296, %v339
    %v528 = vmax.f32 %v298, %v341
    %v529 = vmax.f32 %v521, %v525
    %v530 = vmax.f32 %v522, %v526
    %v531 = vmax.f32 %v523, %v527
    %v532 = vmax.f32 %v524, %v528
    %534 = vset.pattern.permute.xlu0 0
    %535 = vperm.xlu0 %534, %v515
    %v536 = vpop.permute.xlu0 %535
    %539 = vset.pattern.permute.xlu0 0
    %540 = vperm.xlu0 %539, %v516
    %v541 = vpop.permute.xlu0 %540
    %v543 = vadd.f32 %v529, %v536
    %v544 = vadd.f32 %v530, %v536
    %v545 = vadd.f32 %v531, %v541
    %v546 = vadd.f32 %v532, %v541
    %v547 = vmax.f32 %v378, %v421
    %v548 = vmax.f32 %v380, %v423
    %v549 = vmax.f32 %v382, %v425
    %v550 = vmax.f32 %v384, %v427
    %v551 = vmax.f32 %v464, %v507
    %v552 = vmax.f32 %v466, %v509
    %v553 = vmax.f32 %v468, %v511
    %v554 = vmax.f32 %v470, %v513
    %v555 = vmax.f32 %v547, %v551
    %v556 = vmax.f32 %v548, %v552
    %v557 = vmax.f32 %v549, %v553
    %v558 = vmax.f32 %v550, %v554
    %v559 = vadd.f32 %v555, %v536
    %v560 = vadd.f32 %v556, %v536
    %v561 = vadd.f32 %v557, %v541
    %v562 = vadd.f32 %v558, %v541
    %v563 = vpack.c.bf16 %v545, %v543
    %v564 = vpack.c.bf16 %v546, %v544
    %v565 = vpack.c.bf16 %v561, %v559
    %v566 = vpack.c.bf16 %v562, %v560
    %v567 = vld [vmem:[%s3] sm:$0xff]
    %v568 = vld [vmem:[%s3 + $0x8] sm:$0xff]
    %v569 = vld [vmem:[%s3 + $0x10] sm:$0xff]
    %v570 = vld [vmem:[%s3 + $0x18] sm:$0xff]
    %v571 = vld [vmem:[%s3 + $0x20] sm:$0xff]
    %v572 = vld [vmem:[%s3 + $0x28] sm:$0xff]
    %v573 = vld [vmem:[%s3 + $0x30] sm:$0xff]
    %v574 = vld [vmem:[%s3 + $0x38] sm:$0xff]
    %v575 = vld [vmem:[%s3 + $0x40] sm:$0xff]
    %v576 = vld [vmem:[%s3 + $0x48] sm:$0xff]
    %v577 = vld [vmem:[%s3 + $0x50] sm:$0xff]
    %v578 = vld [vmem:[%s3 + $0x58] sm:$0xff]
    %v579 = vld [vmem:[%s3 + $0x60] sm:$0xff]
    %v580 = vld [vmem:[%s3 + $0x68] sm:$0xff]
    %v581 = vld [vmem:[%s3 + $0x70] sm:$0xff]
    %v582 = vld [vmem:[%s3 + $0x78] sm:$0xff]
    %v583 = vld [vmem:[%s3 + $0x80] sm:$0xff]
    %v584 = vld [vmem:[%s3 + $0x88] sm:$0xff]
    %v585 = vld [vmem:[%s3 + $0x90] sm:$0xff]
    %v586 = vld [vmem:[%s3 + $0x98] sm:$0xff]
    %v587 = vld [vmem:[%s3 + $0xa0] sm:$0xff]
    %v588 = vld [vmem:[%s3 + $0xa8] sm:$0xff]
    %v589 = vld [vmem:[%s3 + $0xb0] sm:$0xff]
    %v590 = vld [vmem:[%s3 + $0xb8] sm:$0xff]
    %v591 = vld [vmem:[%s3 + $0xc0] sm:$0xff]
    %v592 = vld [vmem:[%s3 + $0xc8] sm:$0xff]
    %v593 = vld [vmem:[%s3 + $0xd0] sm:$0xff]
    %v594 = vld [vmem:[%s3 + $0xd8] sm:$0xff]
    %v595 = vld [vmem:[%s3 + $0xe0] sm:$0xff]
    %v596 = vld [vmem:[%s3 + $0xe8] sm:$0xff]
    %v597 = vld [vmem:[%s3 + $0xf0] sm:$0xff]
    %v598 = vld [vmem:[%s3 + $0xf8] sm:$0xff]
    %v631 = vunpack.c.l.b16 %v567
    %v632 = vunpack.c.h.b16 %v567
    %v633 = vunpack.c.l.b16 %v568
    %v634 = vunpack.c.h.b16 %v568
    %v635 = vunpack.c.l.b16 %v569
    %v636 = vunpack.c.h.b16 %v569
    %v637 = vunpack.c.l.b16 %v570
    %v638 = vunpack.c.h.b16 %v570
    %v639 = vunpack.c.l.b16 %v571
    %v640 = vunpack.c.h.b16 %v571
    %v641 = vunpack.c.l.b16 %v572
    %v642 = vunpack.c.h.b16 %v572
    %v643 = vunpack.c.l.b16 %v573
    %v644 = vunpack.c.h.b16 %v573
    %v645 = vunpack.c.l.b16 %v574
    %v646 = vunpack.c.h.b16 %v574
    %v647 = vunpack.c.l.b16 %v575
    %v648 = vunpack.c.h.b16 %v575
    %v649 = vunpack.c.l.b16 %v576
    %v650 = vunpack.c.h.b16 %v576
    %v651 = vunpack.c.l.b16 %v577
    %v652 = vunpack.c.h.b16 %v577
    %v653 = vunpack.c.l.b16 %v578
    %v654 = vunpack.c.h.b16 %v578
    %v655 = vunpack.c.l.b16 %v579
    %v656 = vunpack.c.h.b16 %v579
    %v657 = vunpack.c.l.b16 %v580
    %v658 = vunpack.c.h.b16 %v580
    %v659 = vunpack.c.l.b16 %v581
    %v660 = vunpack.c.h.b16 %v581
    %v661 = vunpack.c.l.b16 %v582
    %v662 = vunpack.c.h.b16 %v582
    %v663 = vunpack.c.l.b16 %v583
    %v664 = vunpack.c.h.b16 %v583
    %v665 = vunpack.c.l.b16 %v584
    %v666 = vunpack.c.h.b16 %v584
    %v667 = vunpack.c.l.b16 %v585
    %v668 = vunpack.c.h.b16 %v585
    %v669 = vunpack.c.l.b16 %v586
    %v670 = vunpack.c.h.b16 %v586
    %v671 = vunpack.c.l.b16 %v587
    %v672 = vunpack.c.h.b16 %v587
    %v673 = vunpack.c.l.b16 %v588
    %v674 = vunpack.c.h.b16 %v588
    %v675 = vunpack.c.l.b16 %v589
    %v676 = vunpack.c.h.b16 %v589
    %v677 = vunpack.c.l.b16 %v590
    %v678 = vunpack.c.h.b16 %v590
    %v679 = vunpack.c.l.b16 %v591
    %v680 = vunpack.c.h.b16 %v591
    %v681 = vunpack.c.l.b16 %v592
    %v682 = vunpack.c.h.b16 %v592
    %v683 = vunpack.c.l.b16 %v593
    %v684 = vunpack.c.h.b16 %v593
    %v685 = vunpack.c.l.b16 %v594
    %v686 = vunpack.c.h.b16 %v594
    %v687 = vunpack.c.l.b16 %v595
    %v688 = vunpack.c.h.b16 %v595
    %v689 = vunpack.c.l.b16 %v596
    %v690 = vunpack.c.h.b16 %v596
    %v691 = vunpack.c.l.b16 %v597
    %v692 = vunpack.c.h.b16 %v597
    %v693 = vunpack.c.l.b16 %v598
    %v694 = vunpack.c.h.b16 %v598
    %v695 = vpack.c.b16 %v633, %v631
    %v696 = vpack.c.b16 %v634, %v632
    %v697 = vpack.c.b16 %v637, %v635
    %v698 = vpack.c.b16 %v638, %v636
    %v699 = vpack.c.b16 %v641, %v639
    %v700 = vpack.c.b16 %v642, %v640
    %v701 = vpack.c.b16 %v645, %v643
    %v702 = vpack.c.b16 %v646, %v644
    %v703 = vpack.c.b16 %v649, %v647
    %v704 = vpack.c.b16 %v650, %v648
    %v705 = vpack.c.b16 %v653, %v651
    %v706 = vpack.c.b16 %v654, %v652
    %v707 = vpack.c.b16 %v657, %v655
    %v708 = vpack.c.b16 %v658, %v656
    %v709 = vpack.c.b16 %v661, %v659
    %v710 = vpack.c.b16 %v662, %v660
    %v711 = vpack.c.b16 %v665, %v663
    %v712 = vpack.c.b16 %v666, %v664
    %v713 = vpack.c.b16 %v669, %v667
    %v714 = vpack.c.b16 %v670, %v668
    %v715 = vpack.c.b16 %v673, %v671
    %v716 = vpack.c.b16 %v674, %v672
    %v717 = vpack.c.b16 %v677, %v675
    %v718 = vpack.c.b16 %v678, %v676
    %v719 = vpack.c.b16 %v681, %v679
    %v720 = vpack.c.b16 %v682, %v680
    %v721 = vpack.c.b16 %v685, %v683
    %v722 = vpack.c.b16 %v686, %v684
    %v723 = vpack.c.b16 %v689, %v687
    %v724 = vpack.c.b16 %v690, %v688
    %v725 = vpack.c.b16 %v693, %v691
    %v726 = vpack.c.b16 %v694, %v692
    %759 = vmatprep.subr.bf16.mxu0 %v696
    %760 = vmatpush1.bf16.msra.mxu0 %v695
    %761 = vmatprep.subr.bf16.mxu0 %v698
    %762 = vmatpush1.bf16.msra.mxu0 %v697
    %763 = vmatprep.subr.bf16.mxu0 %v700
    %764 = vmatpush1.bf16.msra.mxu0 %v699
    %765 = vmatprep.subr.bf16.mxu0 %v702
    %766 = vmatpush1.bf16.msra.mxu0 %v701
    %767 = vmatprep.subr.bf16.mxu0 %v704
    %768 = vmatpush1.bf16.msra.mxu0 %v703
    %769 = vmatprep.subr.bf16.mxu0 %v706
    %770 = vmatpush1.bf16.msra.mxu0 %v705
    %771 = vmatprep.subr.bf16.mxu0 %v708
    %772 = vmatpush1.bf16.msra.mxu0 %v707
    %773 = vmatprep.subr.bf16.mxu0 %v710
    %774 = vmatpush1.bf16.msra.mxu0 %v709
    %775 = vmatprep.subr.bf16.mxu0 %v712
    %776 = vmatpush1.bf16.msra.mxu0 %v711
    %777 = vmatprep.subr.bf16.mxu0 %v714
    %778 = vmatpush1.bf16.msra.mxu0 %v713
    %779 = vmatprep.subr.bf16.mxu0 %v716
    %780 = vmatpush1.bf16.msra.mxu0 %v715
    %781 = vmatprep.subr.bf16.mxu0 %v718
    %782 = vmatpush1.bf16.msra.mxu0 %v717
    %783 = vmatprep.subr.bf16.mxu0 %v720
    %784 = vmatpush1.bf16.msra.mxu0 %v719
    %785 = vmatprep.subr.bf16.mxu0 %v722
    %786 = vmatpush1.bf16.msra.mxu0 %v721
    %787 = vmatprep.subr.bf16.mxu0 %v724
    %788 = vmatpush1.bf16.msra.mxu0 %v723
    %789 = vmatprep.subr.bf16.mxu0 %v726
    %790 = vmatpush1.bf16.msra.mxu0 %v725
    %791 = vmatprep.mubr.bf16.mxu0 %v564
    %792 = vmatmul.mubr.bf16.gmra.mrb[0].mxu0 %v563
    %v793 = vpop.f32.mrb[0].mxu0
    %v794 = vadd.f32 0.0, %v793
    %v795 = vpop.f32.mrb[0].mxu0
    %v796 = vadd.f32 0.0, %v795
    %v797 = vpop.f32.mrb[0].mxu0
    %v798 = vadd.f32 0.0, %v797
    %v799 = vpop.f32.mrb[0].mxu0
    %v800 = vadd.f32 0.0, %v799
    %801 = vmatprep.mubr.bf16.mxu0 %v566
    %802 = vmatmul.mubr.bf16.gmra.mrb[0].mxu0 %v565
    %v803 = vpop.f32.mrb[0].mxu0
    %v804 = vadd.f32 0.0, %v803
    %v805 = vpop.f32.mrb[0].mxu0
    %v806 = vadd.f32 0.0, %v805
    %v807 = vpop.f32.mrb[0].mxu0
    %v808 = vadd.f32 0.0, %v807
    %v809 = vpop.f32.mrb[0].mxu0
    %v810 = vadd.f32 0.0, %v809
    %811 = vdwg.mxu0
    %v812 = vmul.f32 %v794, %v517
    %v813 = vmul.f32 %v796, %v518
    %v814 = vmul.f32 %v798, %v519
    %v815 = vmul.f32 %v800, %v520
    %v816 = vadd.f32 %v812, %v814
    %v817 = vrot.slane %v816, 4
    %v818 = vadd.f32 %v816, %v817
    %v819 = vrot.slane %v818, 2
    %v820 = vadd.f32 %v818, %v819
    %v821 = vrot.slane %v820, 1
    %v822 = vadd.f32 %v820, %v821
    %vm823 = vcmask 261120
    %v824 = vsel %vm823, %v813, 0.0
    %v825 = vsel %vm823, %v815, 0.0
    %v826 = vadd.f32 %v824, %v825
    %v827 = vrot.slane %v826, 4
    %v828 = vadd.f32 %v826, %v827
    %v829 = vrot.slane %v828, 2
    %v830 = vadd.f32 %v828, %v829
    %v831 = vrot.slane %v830, 1
    %v832 = vadd.f32 %v830, %v831
    %v833 = vmul.f32 %v804, %v517
    %v834 = vmul.f32 %v806, %v518
    %v835 = vmul.f32 %v808, %v519
    %v836 = vmul.f32 %v810, %v520
    %v837 = vadd.f32 %v833, %v835
    %v838 = vrot.slane %v837, 4
    %v839 = vadd.f32 %v837, %v838
    %v840 = vrot.slane %v839, 2
    %v841 = vadd.f32 %v839, %v840
    %v842 = vrot.slane %v841, 1
    %v843 = vadd.f32 %v841, %v842
    %v844 = vsel %vm823, %v834, 0.0
    %v845 = vsel %vm823, %v836, 0.0
    %v846 = vadd.f32 %v844, %v845
    %v847 = vrot.slane %v846, 4
    %v848 = vadd.f32 %v846, %v847
    %v849 = vrot.slane %v848, 2
    %v850 = vadd.f32 %v848, %v849
    %v851 = vrot.slane %v850, 1
    %v852 = vadd.f32 %v850, %v851
    %vm853 = vcmask 1040384
    %v854 = vsel %vm853, %v822, %v843
    %v855 = vsel %vm853, %v832, %v852
    %v856 = vld [vmem:[%s5] sm:$0xff]
    %v857 = vld [vmem:[%s5 + $0x8] sm:$0xff]
    %v858 = vld [vmem:[%s5 + $0x10] sm:$0xff]
    %v859 = vld [vmem:[%s5 + $0x18] sm:$0xff]
    %v860 = vld [vmem:[%s5 + $0x20] sm:$0xff]
    %v861 = vld [vmem:[%s5 + $0x28] sm:$0xff]
    %v862 = vld [vmem:[%s5 + $0x30] sm:$0xff]
    %v863 = vld [vmem:[%s5 + $0x38] sm:$0xff]
    %v864 = vld [vmem:[%s5 + $0x40] sm:$0xff]
    %v865 = vld [vmem:[%s5 + $0x48] sm:$0xff]
    %v866 = vld [vmem:[%s5 + $0x50] sm:$0xff]
    %v867 = vld [vmem:[%s5 + $0x58] sm:$0xff]
    %v868 = vld [vmem:[%s5 + $0x60] sm:$0xff]
    %v869 = vld [vmem:[%s5 + $0x68] sm:$0xff]
    %v870 = vld [vmem:[%s5 + $0x70] sm:$0xff]
    %v871 = vld [vmem:[%s5 + $0x78] sm:$0xff]
    %v872 = vld [vmem:[%s5 + $0x80] sm:$0xff]
    %v873 = vld [vmem:[%s5 + $0x88] sm:$0xff]
    %v874 = vld [vmem:[%s5 + $0x90] sm:$0xff]
    %v875 = vld [vmem:[%s5 + $0x98] sm:$0xff]
    %v876 = vld [vmem:[%s6] sm:$0x1]
    %v878 = vlaneseq
    %v879 = vshrl.u32 %v878, 7
    %v880 = vsub.s32 0, %v879
    %v881 = vrot.slane %v876, %v880
    %v884 = vsel %vm823, %v855, 0
    %886 = vmatprep.subr.mxu0 0.0
    %887 = vmatpush1.msra.mxu0 %v856
    %888 = vmatprep.subr.mxu0 0.0
    %889 = vmatpush1.msra.mxu0 %v857
    %890 = vmatprep.subr.mxu0 0.0
    %891 = vmatpush1.msra.mxu0 %v858
    %892 = vmatprep.subr.mxu0 0.0
    %893 = vmatpush1.msra.mxu0 %v859
    %894 = vmatprep.subr.mxu0 0.0
    %895 = vmatpush1.msra.mxu0 %v860
    %896 = vmatprep.subr.mxu0 0.0
    %897 = vmatpush1.msra.mxu0 %v861
    %898 = vmatprep.subr.mxu0 0.0
    %899 = vmatpush1.msra.mxu0 %v862
    %900 = vmatprep.subr.mxu0 0.0
    %901 = vmatpush1.msra.mxu0 %v863
    %902 = vmatprep.subr.mxu0 0.0
    %903 = vmatpush1.msra.mxu0 %v864
    %904 = vmatprep.subr.mxu0 0.0
    %905 = vmatpush1.msra.mxu0 %v865
    %906 = vmatprep.subr.mxu0 0.0
    %907 = vmatpush1.msra.mxu0 %v866
    %908 = vmatprep.subr.mxu0 0.0
    %909 = vmatpush1.msra.mxu0 %v867
    %910 = vmatprep.subr.mxu0 0.0
    %911 = vmatpush1.msra.mxu0 %v868
    %912 = vmatprep.subr.mxu0 0.0
    %913 = vmatpush1.msra.mxu0 %v869
    %914 = vmatprep.subr.mxu0 0.0
    %915 = vmatpush1.msra.mxu0 %v870
    %916 = vmatprep.subr.mxu0 0.0
    %917 = vmatpush1.msra.mxu0 %v871
    %918 = vmatprep.subr.mxu0 0.0
    %919 = vmatpush1.msra.mxu0 %v872
    %920 = vmatprep.subr.mxu0 0.0
    %921 = vmatpush1.msra.mxu0 %v873
    %922 = vmatprep.subr.mxu0 0.0
    %923 = vmatpush1.msra.mxu0 %v874
    %924 = vmatprep.subr.mxu0 0.0
    %925 = vmatpush1.msra.mxu0 %v875
    %926 = vmatprep.subr.mxu0 0.0
    %927 = vmatpush1.msra.mxu0 0.0
    %928 = vmatprep.subr.mxu0 0.0
    %929 = vmatpush1.msra.mxu0 0.0
    %930 = vmatprep.subr.mxu0 0.0
    %931 = vmatpush1.msra.mxu0 0.0
    %932 = vmatprep.subr.mxu0 0.0
    %933 = vmatpush1.msra.mxu0 0.0
    %934 = vmatprep.subr.mxu0 0.0
    %935 = vmatpush1.msra.mxu0 0.0
    %936 = vmatprep.subr.mxu0 0.0
    %937 = vmatpush1.msra.mxu0 0.0
    %938 = vmatprep.subr.mxu0 0.0
    %939 = vmatpush1.msra.mxu0 0.0
    %940 = vmatprep.subr.mxu0 0.0
    %941 = vmatpush1.msra.mxu0 0.0
    %942 = vmatprep.subr.mxu0 0.0
    %943 = vmatpush1.msra.mxu0 0.0
    %944 = vmatprep.subr.mxu0 0.0
    %945 = vmatpush1.msra.mxu0 0.0
    %946 = vmatprep.subr.mxu0 0.0
    %947 = vmatpush1.msra.mxu0 0.0
    %948 = vmatprep.subr.mxu0 0.0
    %949 = vmatpush1.msra.mxu0 0.0
    %950 = vmatprep.mubr.f32.mxu0 %v884
    %951 = vmatmul.mubr.f32.gmra.mrb[0].mxu0 %v854
    %v952 = vpop.f32.mrb[0].mxu0
    %v953 = vadd.f32 %v881, %v952
    %v954 = vpop.f32.mrb[0].mxu0
    %955 = vdwg.mxu0
    %vm956 = vcmask 74752
    %957 = vst.msk [vmem:[#allocation2] sm:$0x3] %vm956, %v953
    // Predicated region
    $region30: #{testnet_forward.1} parent=1 // pred_check
      _
    $region31: #{testnet_forward.1} parent=1 // pred_check_branch
      %959 = sbr.rel (0) target = $region33
    $region32: #{testnet_forward.1} parent=1 // pred_region
      %s961 = ssub.s32 32, 32
      %962 = vsyncadd [#allocation3], %s961
      %s964 = sshll.u32 [#allocation2], 4
      %s965 = int_to_ptr.vmem [resolvable:$true] %s964
      %967 = dma.vmem_to_hbm [thread:$0]  %s965, 32, %s7, [#allocation3]
    $region33: #{testnet_forward.1} parent=1 // pred_fallthru
      _
    // Predicated region
    $region34: #{testnet_forward.1} parent=1 // pred_check
      _
    $region35: #{testnet_forward.1} parent=1 // pred_check_branch
      %969 = sbr.rel (0) target = $region37
    $region36: #{testnet_forward.1} parent=1 // pred_region
      %970 = dma.done [#allocation3], 32
    $region37: #{testnet_forward.1} parent=1 // pred_fallthru
      _
    %971 = vsyncpa [#allocation3], 1

</llo_original>
